<compile_context>
chip_gen: v7x
topology: tpu7x:2x2x1
jax: 0.10.0
libtpu: 0.0.40
codegen_flags: <defaults>
</compile_context>

<pallas_src>
import functools

import jax
import jax.numpy as jnp
from jax import lax
from jax.experimental import pallas as pl
from jax.experimental.pallas import tpu as pltpu


_LANE = 128


def _round_up(x, m):
    return ((x + m - 1) // m) * m


def _pad2d(a, rows, cols):
    pr, pc = rows - a.shape[0], cols - a.shape[1]
    if pr == 0 and pc == 0:
        return a
    return jnp.pad(a, ((0, pr), (0, pc)))


@functools.lru_cache(maxsize=1)
def _hw_config():
    """(vmem_limit_bytes, n_tensorcores) for the current TPU generation."""
    kind = ""
    try:
        kind = jax.devices()[0].device_kind.lower()
    except Exception:
        pass
    if "7" in kind:                            # v7x: 64 MiB VMEM/TC, 2 TCs/chip
        phys_vmem, n_tc = 64 << 20, 2
    elif ("v4" in kind or "v5p" in kind) and "lite" not in kind:
        phys_vmem, n_tc = 128 << 20, 2         # megacore generations
    else:                                      # v5e / v6e: single TC, 128 MiB
        phys_vmem, n_tc = 128 << 20, 1
    try:                                       # prefer the exact figure if available
        info = pltpu.get_tpu_info()
        v = getattr(info, "vmem_capacity_bytes", None)
        if v:
            phys_vmem = int(v)
    except Exception:
        pass
    vmem_limit = min(int(phys_vmem * 3 // 4), 100 << 20)
    return vmem_limit, n_tc


def _tile_plan(rows_true, row_unit, per_row_bytes, fixed_bytes, vmem_budget,
               n_tc, target_rows):
    """Largest row tile (multiple of row_unit) fitting the VMEM budget."""
    avail = vmem_budget - fixed_bytes
    cap_rows = max(row_unit, avail // max(per_row_bytes, 1)) if avail > 0 else row_unit
    tile_rows = max(row_unit, (min(target_rows, cap_rows) // row_unit) * row_unit)
    rows_min = _round_up(rows_true, row_unit)
    tile_rows = min(tile_rows, rows_min)
    n_tiles = -(-rows_min // tile_rows)
    n_outer = n_tc if n_tiles >= n_tc else 1
    n_inner = -(-n_tiles // n_outer)
    rows_pad = n_outer * n_inner * tile_rows
    return tile_rows, n_outer, n_inner, rows_pad


# ----------------------------------------------------------------------------
# Pallas kernels
# ----------------------------------------------------------------------------
def _mid_layer_kernel(x_ref, w_ref, scale_ref, shift_ref, z_ref, m1_ref, m2_ref):
    """One intermediate layer: z = relu((x@W)*scale + shift); accumulates
    M1 = colsum(z), M2 = z^T z (this layer's output moments -> next BN stats).
    No row masking in-kernel: the padded rows' constant contribution is removed
    analytically in XLA by the caller."""
    @pl.when(pl.program_id(1) == 0)
    def _():
        m1_ref[...] = jnp.zeros_like(m1_ref)
        m2_ref[...] = jnp.zeros_like(m2_ref)

    y = jnp.dot(x_ref[...], w_ref[...], preferred_element_type=jnp.float32)
    # conv bias dropped (cancelled by BN mean subtraction); BN folded into one FMA.
    z = jnp.maximum(y * scale_ref[...] + shift_ref[...], 0.0)
    zs = z.astype(z_ref.dtype)
    z_ref[...] = zs
    # M1 from the f32 z (no extra cast pass); M2 from the stored dtype so the
    # MXU consumes bf16 and the stats match what the next layer actually reads.
    m1_ref[...] += jnp.sum(z, axis=0, keepdims=True)[None]
    m2_ref[...] += lax.dot_general(
        zs, zs, (((0,), (0,)), ((), ())),
        preferred_element_type=jnp.float32)[None]


def _last_layer_kernel(x_ref, w_ref, scale_ref, shift_ref, o_ref, *, nsample):
    """Last layer with the neighbor max fused: K consecutive rows -> 1 row."""
    y = jnp.dot(x_ref[...], w_ref[...], preferred_element_type=jnp.float32)
    z = jnp.maximum(y * scale_ref[...] + shift_ref[...], 0.0)
    g = z.shape[0] // nsample
    o_ref[...] = jnp.max(z.reshape(g, nsample, z.shape[1]), axis=1).astype(o_ref.dtype)


def _plain_layer_kernel(x_ref, w_ref, scale_ref, shift_ref, z_ref):
    """Fallback last layer without the fused max (K not a multiple of 8)."""
    y = jnp.dot(x_ref[...], w_ref[...], preferred_element_type=jnp.float32)
    z_ref[...] = jnp.maximum(y * scale_ref[...] + shift_ref[...], 0.0).astype(z_ref.dtype)


# ----------------------------------------------------------------------------
# pallas_call wrappers
# ----------------------------------------------------------------------------
def _common_in_specs(tile_rows, cin, cpad, n_inner):
    return [
        pl.BlockSpec((tile_rows, cin), lambda o, i: (o * n_inner + i, 0)),
        pl.BlockSpec((cin, cpad), lambda o, i: (0, 0)),
        pl.BlockSpec((1, cpad), lambda o, i: (0, 0)),
        pl.BlockSpec((1, cpad), lambda o, i: (0, 0)),
    ]


def _mid_layer(x, wp, scale, shift, *, tile_rows, n_outer, n_inner,
               store_dtype, vmem_limit):
    rows_pad, cin = x.shape
    cpad = wp.shape[1]
    sb = jnp.dtype(store_dtype).itemsize
    bytes_io = (rows_pad * cin * x.dtype.itemsize      # x read
                + rows_pad * cpad * sb                 # z write
                + cin * cpad * wp.dtype.itemsize       # weights
                + n_outer * (cpad * cpad + cpad) * 4   # m2 / m1 partials
                + 2 * cpad * 4)                        # scale, shift
    z, m1p, m2p = pl.pallas_call(
        _mid_layer_kernel,
        grid=(n_outer, n_inner),
        in_specs=_common_in_specs(tile_rows, cin, cpad, n_inner),
        out_specs=[
            pl.BlockSpec((tile_rows, cpad), lambda o, i: (o * n_inner + i, 0)),
            pl.BlockSpec((1, 1, cpad), lambda o, i: (o, 0, 0)),
            pl.BlockSpec((1, cpad, cpad), lambda o, i: (o, 0, 0)),
        ],
        out_shape=[
            jax.ShapeDtypeStruct((rows_pad, cpad), store_dtype),
            jax.ShapeDtypeStruct((n_outer, 1, cpad), jnp.float32),
            jax.ShapeDtypeStruct((n_outer, cpad, cpad), jnp.float32),
        ],
        compiler_params=pltpu.CompilerParams(
            dimension_semantics=("parallel", "arbitrary"),
            vmem_limit_bytes=vmem_limit),
        cost_estimate=pl.CostEstimate(
            flops=int(2 * rows_pad * cpad * (cin + cpad)),
            transcendentals=0,
            bytes_accessed=int(bytes_io)),
    )(x, wp, scale, shift)
    return z, jnp.sum(m1p, axis=0), jnp.sum(m2p, axis=0)


def _last_layer_fused(x, wp, scale, shift, *, nsample, tile_rows, n_outer,
                      n_inner, vmem_limit):
    rows_pad, cin = x.shape
    cpad = wp.shape[1]
    g = tile_rows // nsample
    r_pad = rows_pad // nsample
    return pl.pallas_call(
        functools.partial(_last_layer_kernel, nsample=nsample),
        grid=(n_outer, n_inner),
        in_specs=_common_in_specs(tile_rows, cin, cpad, n_inner),
        out_specs=pl.BlockSpec((g, cpad), lambda o, i: (o * n_inner + i, 0)),
        out_shape=jax.ShapeDtypeStruct((r_pad, cpad), jnp.float32),
        compiler_params=pltpu.CompilerParams(
            dimension_semantics=("parallel", "parallel"),
            vmem_limit_bytes=vmem_limit),
        cost_estimate=pl.CostEstimate(
            flops=int(2 * rows_pad * cin * cpad),
            transcendentals=0,
            bytes_accessed=int(rows_pad * cin * x.dtype.itemsize
                               + r_pad * cpad * 4
                               + cin * cpad * wp.dtype.itemsize)),
    )(x, wp, scale, shift)


def _plain_layer(x, wp, scale, shift, *, tile_rows, n_outer, n_inner,
                 out_dtype, vmem_limit):
    rows_pad, cin = x.shape
    cpad = wp.shape[1]
    return pl.pallas_call(
        _plain_layer_kernel,
        grid=(n_outer, n_inner),
        in_specs=_common_in_specs(tile_rows, cin, cpad, n_inner),
        out_specs=pl.BlockSpec((tile_rows, cpad), lambda o, i: (o * n_inner + i, 0)),
        out_shape=jax.ShapeDtypeStruct((rows_pad, cpad), out_dtype),
        compiler_params=pltpu.CompilerParams(
            dimension_semantics=("parallel", "parallel"),
            vmem_limit_bytes=vmem_limit),
        cost_estimate=pl.CostEstimate(
            flops=int(2 * rows_pad * cin * cpad),
            transcendentals=0,
            bytes_accessed=int(rows_pad * cin * x.dtype.itemsize
                               + rows_pad * cpad * jnp.dtype(out_dtype).itemsize
                               + cin * cpad * wp.dtype.itemsize)),
    )(x, wp, scale, shift)


# ----------------------------------------------------------------------------
# MLP stack + neighbor-max driver
# ----------------------------------------------------------------------------
def pointnet_mlp_max(grouped, params, *, eps=1e-5, store_dtype=jnp.bfloat16,
                     target_tile_rows=16384):
    """grouped: (B, S, K, CD) channels-last.  Returns (B, S, C_last) float32."""
    B, S, K, CD = grouped.shape
    R = B * S
    rows_true = R * K
    c_last = params[-1][0].shape[1]
    store_dtype = jnp.dtype(store_dtype)
    sb = store_dtype.itemsize
    vmem_limit, n_tc = _hw_config()

    # pad the narrow raw channel dim to a multiple of 8 (cheap; avoids 7-lane rows)
    CD_pad = _round_up(CD, 8)
    if CD_pad != CD:
        grouped = jnp.pad(grouped, ((0, 0), (0, 0), (0, 0), (0, CD_pad - CD)))

    # k-minor flattening: row = (b*S + s)*K + k   (no transpose, free reshape)
    x = grouped.reshape(rows_true, CD_pad).astype(store_dtype)

    # layer-0 input moments: bf16 MXU matmul, no f32 materialisation / transpose.
    m1 = jnp.sum(x, axis=0, keepdims=True, dtype=jnp.float32)          # (1, CD_pad)
    m2 = lax.dot_general(x, x, (((0,), (0,)), ((), ())),
                         preferred_element_type=jnp.float32)           # (CD_pad, CD_pad)

    # generation-aware VMEM budget -> row-tile plan (shared by all layers)
    cpads = [_round_up(p[0].shape[1], _LANE) for p in params]
    cins = [CD_pad] + cpads[:-1]
    max_c = max(cpads + cins)
    per_row = 2 * sb * max(ci + co for ci, co in zip(cins, cpads))     # dbl-buffered x+z
    fixed = (2 * sb * max(ci * co for ci, co in zip(cins, cpads))      # weights
             + 2 * 4 * (max_c * max_c + 3 * max_c)                     # m2/m1/scale/shift
             + (4 << 20))                                              # slack
    fuse_max = (K % 8 == 0) and ((8 * K) * per_row + fixed <= vmem_limit)
    unit = 8 * K if fuse_max else 16
    tile_rows, n_outer, n_inner, rows_pad = _tile_plan(
        rows_true, unit, per_row, fixed, vmem_limit, n_tc, target_tile_rows)

    n_pad = rows_pad - rows_true
    if n_pad:
        x = jnp.pad(x, ((0, n_pad), (0, 0)))

    inv_n = 1.0 / float(rows_true)
    n_layers = len(params)
    # analytic value of a zero-padded input row as it flows through the stack
    p_store = jnp.zeros((1, CD_pad), jnp.float32)
    out = None
    for li, (w, _unused_bias, gamma, beta) in enumerate(params):
        cin = x.shape[1]
        cout = w.shape[1]
        cpad = cpads[li]                              # lane-dense output columns
        wp = _pad2d(w, cin, cpad)
        gp = _pad2d(gamma, 1, cpad)                   # padded channels: gamma=0
        bp = _pad2d(beta, 1, cpad)                    #                  beta=0
        # BN(train) stats of y = x @ W from the input moments; W rounded to the
        # kernel's matmul dtype so the stats match what the kernel computes.
        wq = wp.astype(store_dtype).astype(jnp.float32)
        mean = (m1 @ wq) * inv_n                                      # (1, cpad)
        e2 = jnp.einsum('ac,ab,bc->c', wq, m2, wq)[None, :] * inv_n
        # TODO(synk): E[y^2]-E[y]^2 can cancel when |mean|>>std; clamped at 0
        # and guarded by eps (fine for the observed activation ranges).
        var = jnp.maximum(e2 - mean * mean, 0.0)
        scale = gp * lax.rsqrt(var + eps)
        shift = bp - mean * scale
        wk = wp.astype(store_dtype)

        if li < n_layers - 1:
            x, m1, m2 = _mid_layer(
                x, wk, scale, shift, tile_rows=tile_rows, n_outer=n_outer,
                n_inner=n_inner, store_dtype=store_dtype, vmem_limit=vmem_limit)
            if n_pad:
                # exact removal of the padded rows' (constant) contribution to
                # the streamed moments -> no masking inside the kernel.
                p_f32 = jnp.maximum((p_store @ wq) * scale + shift, 0.0)
                p_store = p_f32.astype(store_dtype).astype(jnp.float32)
                m1 = m1 - n_pad * p_f32
                m2 = m2 - n_pad * (p_store.T @ p_store)
        elif fuse_max:
            out = _last_layer_fused(
                x, wk, scale, shift, nsample=K, tile_rows=tile_rows,
                n_outer=n_outer, n_inner=n_inner, vmem_limit=vmem_limit)
            out = out[:R, :cout]
        else:
            # TODO(synk): K not a multiple of 8 (or K-groups too large for the
            # VMEM budget) -> neighbor max not fused; reduce in XLA on a
            # store_dtype copy instead of the old f32 round trip.
            z = _plain_layer(x, wk, scale, shift, tile_rows=tile_rows,
                             n_outer=n_outer, n_inner=n_inner,
                             out_dtype=store_dtype, vmem_limit=vmem_limit)
            out = jnp.max(z[:rows_true, :cout].reshape(R, K, cout),
                          axis=1).astype(jnp.float32)

    return out.reshape(B, S, c_last).astype(jnp.float32)


# ----------------------------------------------------------------------------
# Plain-JAX glue: sampling / grouping (data-dependent gathers)
# ----------------------------------------------------------------------------
def _batched_gather(feats, idx):
    """feats: (B, N, D), idx: (B, ...) int -> (B, ..., D)   (== knn_gather)."""
    return jax.vmap(lambda f, i: f[i])(feats, idx)


def farthest_point_sample(xyz, npoint):
    """xyz: (B, N, 3) -> (fps_xyz (B, npoint, 3), fps_idx (B, npoint))."""
    B, N, _ = xyz.shape

    def body(i, state):
        idx, dists, farthest = state
        idx = idx.at[:, i].set(farthest)
        centroid = jax.vmap(lambda p, j: p[j])(xyz, farthest)          # (B, 3)
        d = jnp.sum(jnp.square(xyz - centroid[:, None, :]), axis=-1)   # (B, N)
        dists = jnp.minimum(dists, d)
        farthest = jnp.argmax(dists, axis=-1).astype(jnp.int32)
        return idx, dists, farthest

    idx0 = jnp.zeros((B, npoint), dtype=jnp.int32)
    dists0 = jnp.full((B, N), 1e10, dtype=jnp.float32)
    # TODO(synk): PyTorch FPS starts from a random point; here the start index is 0.
    far0 = jnp.zeros((B,), dtype=jnp.int32)
    idx, _, _ = jax.lax.fori_loop(0, npoint, body, (idx0, dists0, far0))
    return _batched_gather(xyz, idx), idx


def ball_query_nearest(query_pcs, source_pcs, radius, k):
    """Nearest-k neighbors of each query within `radius`; out-of-radius slots
    fall back to the nearest neighbor (use_nearest=True semantics)."""
    d2 = jnp.sum(
        jnp.square(query_pcs[:, :, None, :] - source_pcs[:, None, :, :]), axis=-1
    )  # (B, S, N)
    _, idx = jax.lax.top_k(-d2, k)
    idx = idx.astype(jnp.int32)
    d2k = jnp.take_along_axis(d2, idx, axis=-1)
    nearest = idx[..., :1]
    # TODO(synk): exact library semantics of ball_query(use_nearest=True) unknown;
    # assuming nearest-k-within-radius with fallback to the closest point.
    return jnp.where(d2k <= radius * radius, idx, nearest)


def sample_and_group(npoint, nsample, radius, xyz, features=None):
    fps_xyz, _ = farthest_point_sample(xyz, npoint)
    idx = ball_query_nearest(fps_xyz, xyz, radius, nsample)
    grouped_xyz = _batched_gather(xyz, idx) - fps_xyz[:, :, None, :]   # (B,S,K,3)
    if features is not None:
        grouped_feats = _batched_gather(features, idx)                 # (B,S,K,D)
        grouped = jnp.concatenate([grouped_xyz, grouped_feats], axis=-1)
    else:
        grouped = grouped_xyz
    return fps_xyz, grouped


def sample_and_group_all(xyz, features=None):
    B, _, C = xyz.shape
    zero_xyz = jnp.zeros((B, 1, C), xyz.dtype)
    grouped_xyz = xyz[:, None, :, :]                                   # (B,1,N,3)
    if features is not None:
        grouped = jnp.concatenate([grouped_xyz, features[:, None, :, :]], axis=-1)
    else:
        grouped = grouped_xyz
    return zero_xyz, grouped


# ----------------------------------------------------------------------------
# Module
# ----------------------------------------------------------------------------
class PointNetSetAbstraction:
    def __init__(self, npoint, radius, nsample, in_channel, mlp, group_all, key):
        self.npoint = npoint
        self.radius = radius
        self.nsample = nsample
        self.group_all = group_all
        self.params = []
        last = in_channel
        for out_c in mlp:
            key, kw, kb = jax.random.split(key, 3)
            bound = 1.0 / (last ** 0.5)
            # Conv2d(last, out_c, 1) weight (out,in,1,1) stored transposed as (in,out)
            w = jax.random.uniform(kw, (last, out_c), jnp.float32, -bound, bound)
            # bias kept for parity with the PyTorch module, but it is exactly
            # cancelled by the training-mode BN mean subtraction (unused in kernel)
            b = jax.random.uniform(kb, (1, out_c), jnp.float32, -bound, bound)
            gamma = jnp.ones((1, out_c), jnp.float32)
            beta = jnp.zeros((1, out_c), jnp.float32)
            self.params.append((w, b, gamma, beta))
            last = out_c
        # TODO(synk): BatchNorm2d running_mean/running_var (momentum updates) are
        # not tracked; only training-mode batch statistics are used here.

    def __call__(self, xyz, features=None):
        if self.group_all:
            new_xyz, grouped = sample_and_group_all(xyz, features)
        else:
            new_xyz, grouped = sample_and_group(
                self.npoint, self.nsample, self.radius, xyz, features)
        new_features = pointnet_mlp_max(grouped, self.params)   # (B, S, C_last)
        return new_xyz, new_features


# ----------------------------------------------------------------------------
# Reference (plain JAX, f32) for a numerical sanity check
# ----------------------------------------------------------------------------
def _reference_mlp_max(grouped, params, eps=1e-5):
    B, S, K, CD = grouped.shape
    x = grouped.reshape(B * S * K, CD).astype(jnp.float32)
    for w, b, gamma, beta in params:
        y = x @ w + b
        mean = jnp.mean(y, axis=0, keepdims=True)
        var = jnp.mean(jnp.square(y - mean), axis=0, keepdims=True)
        x = jnp.maximum((y - mean) * lax.rsqrt(var + eps) * gamma + beta, 0.0)
    return jnp.max(x.reshape(B, S, K, -1), axis=2)


# ----------------------------------------------------------------------------
# Demo
# ----------------------------------------------------------------------------
if __name__ == "__main__":
    key = jax.random.PRNGKey(0)
    kx, kf, kp1, kp2 = jax.random.split(key, 4)

    B, N, D = 2, 16, 4
    xyz = jax.random.normal(kx, (B, N, 3), jnp.float32)
    features = jax.random.normal(kf, (B, N, D), jnp.float32)

    # FPS + ball-query path
    sa = PointNetSetAbstraction(
        npoint=8, radius=0.8, nsample=8, in_channel=3 + D,
        mlp=[16, 32], group_all=False, key=kp1,
    )
    new_xyz, new_feats = sa(xyz, features)
    jax.block_until_ready((new_xyz, new_feats))
    assert new_xyz.shape == (B, 8, 3)
    assert new_feats.shape == (B, 8, 32)
    assert bool(jnp.all(jnp.isfinite(new_feats)))

    # group_all path (exercises row padding + analytic moment correction)
    sa_all = PointNetSetAbstraction(
        npoint=None, radius=None, nsample=None, in_channel=3 + D,
        mlp=[16, 32], group_all=True, key=kp2,
    )
    nx2, nf2 = sa_all(xyz, features)
    jax.block_until_ready((nx2, nf2))
    assert nx2.shape == (B, 1, 3)
    assert nf2.shape == (B, 1, 32)
    assert bool(jnp.all(jnp.isfinite(nf2)))

    # numerical checks against the plain-JAX reference
    _, grouped = sample_and_group(8, 8, 0.8, xyz, features)
    ref = _reference_mlp_max(grouped, sa.params)
    got_f32 = pointnet_mlp_max(grouped, sa.params, store_dtype=jnp.float32)
    err = float(jnp.max(jnp.abs(got_f32 - ref)))
    assert err < 1e-2, f"f32 mismatch vs reference: {err}"

    got_bf16 = pointnet_mlp_max(grouped, sa.params)   # default bf16 storage
    err_bf16 = float(jnp.max(jnp.abs(got_bf16 - ref)))
    assert err_bf16 < 0.3, f"bf16 mismatch vs reference: {err_bf16}"

    # group_all path (padded rows) against the reference
    _, grouped_all = sample_and_group_all(xyz, features)
    ref_all = _reference_mlp_max(grouped_all, sa_all.params)
    got_all = pointnet_mlp_max(grouped_all, sa_all.params, store_dtype=jnp.float32)
    err_all = float(jnp.max(jnp.abs(got_all - ref_all)))
    assert err_all < 1e-2, f"group_all mismatch vs reference: {err_all}"

    print("KERNEL_OK")
</pallas_src>

<mosaic_0001>
module attributes {stable_mosaic.version = 11 : i64} {
  func.func @_mid_layer_kernel(%arg0: i32, %arg1: i32, %arg2: memref<128x8xbf16, #tpu.memory_space<vmem>>, %arg3: memref<8x128xbf16, #tpu.memory_space<vmem>>, %arg4: memref<1x128xf32, #tpu.memory_space<vmem>>, %arg5: memref<1x128xf32, #tpu.memory_space<vmem>>, %arg6: memref<128x128xbf16, #tpu.memory_space<vmem>>, %arg7: memref<1x1x128xf32, #tpu.memory_space<vmem>>, %arg8: memref<1x128x128xf32, #tpu.memory_space<vmem>>) attributes {dimension_semantics = [#tpu.dimension_semantics<parallel>, #tpu.dimension_semantics<arbitrary>], iteration_bounds = array<i64: 1, 1>, scalar_prefetch = 0 : i64, scratch_operands = 0 : i64, tpu.core_type = #tpu.core_type<tc>, window_params = [{transform_indices = @transform_0, window_bounds = array<i64: 128, 8>}, {pipeline_mode = #tpu.pipeline_mode<synchronous>, transform_indices = @transform_1, window_bounds = array<i64: 8, 128>}, {pipeline_mode = #tpu.pipeline_mode<synchronous>, transform_indices = @transform_2, window_bounds = array<i64: 1, 128>}, {pipeline_mode = #tpu.pipeline_mode<synchronous>, transform_indices = @transform_3, window_bounds = array<i64: 1, 128>}, {transform_indices = @transform_4, window_bounds = array<i64: 128, 128>}, {transform_indices = @transform_5, window_bounds = array<i64: 1, 1, 128>}, {transform_indices = @transform_6, window_bounds = array<i64: 1, 128, 128>}]} {
    %c0_i32 = arith.constant 0 : i32
    %0 = arith.cmpi eq, %arg1, %c0_i32 : i32
    %1 = arith.extui %0 : i1 to i32
    %c0_i32_0 = arith.constant 0 : i32
    %2 = arith.cmpi ne, %1, %c0_i32_0 : i32
    scf.if %2 {
      %cst_25 = arith.constant 0.000000e+00 : f32
      %27 = vector.broadcast %cst_25 : f32 to vector<1x1x128xf32>
      %c0_26 = arith.constant 0 : index
      %c0_27 = arith.constant 0 : index
      %c0_28 = arith.constant 0 : index
      %28 = vector.load %arg7[%c0_26, %c0_27, %c0_28] : memref<1x1x128xf32, #tpu.memory_space<vmem>>, vector<1x1x128xf32>
      tpu.vector_store %arg7[%c0_26, %c0_27, %c0_28], %27 {strides = array<i32>} : memref<1x1x128xf32, #tpu.memory_space<vmem>>, vector<1x1x128xf32>,
      %cst_29 = arith.constant 0.000000e+00 : f32
      %29 = vector.broadcast %cst_29 : f32 to vector<1x128x128xf32>
      %c0_30 = arith.constant 0 : index
      %c0_31 = arith.constant 0 : index
      %c0_32 = arith.constant 0 : index
      %30 = vector.load %arg8[%c0_30, %c0_31, %c0_32] : memref<1x128x128xf32, #tpu.memory_space<vmem>>, vector<1x128x128xf32>
      tpu.vector_store %arg8[%c0_30, %c0_31, %c0_32], %29 {strides = array<i32>} : memref<1x128x128xf32, #tpu.memory_space<vmem>>, vector<1x128x128xf32>,
    } else {
    }
    %c0 = arith.constant 0 : index
    %c0_1 = arith.constant 0 : index
    %3 = vector.load %arg2[%c0, %c0_1] : memref<128x8xbf16, #tpu.memory_space<vmem>>, vector<128x8xbf16>
    %c0_2 = arith.constant 0 : index
    %c0_3 = arith.constant 0 : index
    %4 = vector.load %arg3[%c0_2, %c0_3] : memref<8x128xbf16, #tpu.memory_space<vmem>>, vector<8x128xbf16>
    %cst = arith.constant dense<0.000000e+00> : vector<128x128xf32>
    %5 = tpu.matmul %3, %4, %cst {dimension_numbers = #tpu.dot_dimension_numbers<[1], [0], [0], [1], [0, 0, 1, 1], [], []>} : vector<128x8xbf16>, vector<8x128xbf16>, vector<128x128xf32> -> vector<128x128xf32>
    %c0_4 = arith.constant 0 : index
    %c0_5 = arith.constant 0 : index
    %6 = vector.load %arg4[%c0_4, %c0_5] : memref<1x128xf32, #tpu.memory_space<vmem>>, vector<1x128xf32>
    %7 = vector.broadcast %6 : vector<1x128xf32> to vector<128x128xf32>
    %8 = arith.mulf %5, %7 : vector<128x128xf32>
    %c0_6 = arith.constant 0 : index
    %c0_7 = arith.constant 0 : index
    %9 = vector.load %arg5[%c0_6, %c0_7] : memref<1x128xf32, #tpu.memory_space<vmem>>, vector<1x128xf32>
    %10 = vector.broadcast %9 : vector<1x128xf32> to vector<128x128xf32>
    %11 = arith.addf %8, %10 : vector<128x128xf32>
    %cst_8 = arith.constant 0.000000e+00 : f32
    %12 = vector.broadcast %cst_8 : f32 to vector<128x128xf32>
    %13 = arith.maximumf %11, %12 : vector<128x128xf32>
    %14 = arith.truncf %13 : vector<128x128xf32> to vector<128x128xbf16>
    %c0_9 = arith.constant 0 : index
    %c0_10 = arith.constant 0 : index
    %15 = vector.load %arg6[%c0_9, %c0_10] : memref<128x128xbf16, #tpu.memory_space<vmem>>, vector<128x128xbf16>
    tpu.vector_store %arg6[%c0_9, %c0_10], %14 {strides = array<i32>} : memref<128x128xbf16, #tpu.memory_space<vmem>>, vector<128x128xbf16>,
    %c0_11 = arith.constant 0 : index
    %c0_12 = arith.constant 0 : index
    %c0_13 = arith.constant 0 : index
    %16 = vector.load %arg7[%c0_11, %c0_12, %c0_13] : memref<1x1x128xf32, #tpu.memory_space<vmem>>, vector<1x1x128xf32>
    %cst_14 = arith.constant dense<0.000000e+00> : vector<128xf32>
    %17 = vector.multi_reduction <add>, %13, %cst_14 [0] : vector<128x128xf32> to vector<128xf32>
    %18 = vector.shape_cast %17 : vector<128xf32> to vector<1x128xf32>
    %19 = vector.shape_cast %18 : vector<1x128xf32> to vector<1x1x128xf32>
    %20 = arith.addf %16, %19 : vector<1x1x128xf32>
    %c0_15 = arith.constant 0 : index
    %c0_16 = arith.constant 0 : index
    %c0_17 = arith.constant 0 : index
    %21 = vector.load %arg7[%c0_15, %c0_16, %c0_17] : memref<1x1x128xf32, #tpu.memory_space<vmem>>, vector<1x1x128xf32>
    tpu.vector_store %arg7[%c0_15, %c0_16, %c0_17], %20 {strides = array<i32>} : memref<1x1x128xf32, #tpu.memory_space<vmem>>, vector<1x1x128xf32>,
    %c0_18 = arith.constant 0 : index
    %c0_19 = arith.constant 0 : index
    %c0_20 = arith.constant 0 : index
    %22 = vector.load %arg8[%c0_18, %c0_19, %c0_20] : memref<1x128x128xf32, #tpu.memory_space<vmem>>, vector<1x128x128xf32>
    %cst_21 = arith.constant dense<0.000000e+00> : vector<128x128xf32>
    %23 = tpu.matmul %14, %14, %cst_21 {dimension_numbers = #tpu.dot_dimension_numbers<[0], [0], [1], [1], [0, 1, 1, 1], [], []>} : vector<128x128xbf16>, vector<128x128xbf16>, vector<128x128xf32> -> vector<128x128xf32>
    %24 = vector.shape_cast %23 : vector<128x128xf32> to vector<1x128x128xf32>
    %25 = arith.addf %22, %24 : vector<1x128x128xf32>
    %c0_22 = arith.constant 0 : index
    %c0_23 = arith.constant 0 : index
    %c0_24 = arith.constant 0 : index
    %26 = vector.load %arg8[%c0_22, %c0_23, %c0_24] : memref<1x128x128xf32, #tpu.memory_space<vmem>>, vector<1x128x128xf32>
    tpu.vector_store %arg8[%c0_22, %c0_23, %c0_24], %25 {strides = array<i32>} : memref<1x128x128xf32, #tpu.memory_space<vmem>>, vector<1x128x128xf32>,
    return
  }
  func.func @transform_0(%arg0: i32, %arg1: i32) -> (i32, i32) {
    %c1_i32 = arith.constant 1 : i32
    %0 = arith.muli %arg0, %c1_i32 : i32
    %1 = arith.addi %0, %arg1 : i32
    %c0_i32 = arith.constant 0 : i32
    %c0_i32_0 = arith.constant 0 : i32
    return %1, %c0_i32 : i32, i32
  }
  func.func @transform_1(%arg0: i32, %arg1: i32) -> (i32, i32) {
    %c0_i32 = arith.constant 0 : i32
    %c0_i32_0 = arith.constant 0 : i32
    %c0_i32_1 = arith.constant 0 : i32
    return %c0_i32, %c0_i32_0 : i32, i32
  }
  func.func @transform_2(%arg0: i32, %arg1: i32) -> (i32, i32) {
    %c0_i32 = arith.constant 0 : i32
    %c0_i32_0 = arith.constant 0 : i32
    %c0_i32_1 = arith.constant 0 : i32
    return %c0_i32, %c0_i32_0 : i32, i32
  }
  func.func @transform_3(%arg0: i32, %arg1: i32) -> (i32, i32) {
    %c0_i32 = arith.constant 0 : i32
    %c0_i32_0 = arith.constant 0 : i32
    %c0_i32_1 = arith.constant 0 : i32
    return %c0_i32, %c0_i32_0 : i32, i32
  }
  func.func @transform_4(%arg0: i32, %arg1: i32) -> (i32, i32) {
    %c1_i32 = arith.constant 1 : i32
    %0 = arith.muli %arg0, %c1_i32 : i32
    %1 = arith.addi %0, %arg1 : i32
    %c0_i32 = arith.constant 0 : i32
    %c0_i32_0 = arith.constant 0 : i32
    return %1, %c0_i32 : i32, i32
  }
  func.func @transform_5(%arg0: i32, %arg1: i32) -> (i32, i32, i32) {
    %c0_i32 = arith.constant 0 : i32
    %c0_i32_0 = arith.constant 0 : i32
    %c0_i32_1 = arith.constant 0 : i32
    return %arg0, %c0_i32, %c0_i32_0 : i32, i32, i32
  }
  func.func @transform_6(%arg0: i32, %arg1: i32) -> (i32, i32, i32) {
    %c0_i32 = arith.constant 0 : i32
    %c0_i32_0 = arith.constant 0 : i32
    %c0_i32_1 = arith.constant 0 : i32
    return %arg0, %c0_i32, %c0_i32_0 : i32, i32, i32
  }
}

</mosaic_0001>

<llo_original>
// kernel: tpu_custom_call.1
$region0: #{tpu_custom_call.1}
  #allocation0 [shape = 'u32[]', space=smem, size = 0x4, offset = 0x4, fixed_abs, tag = 'smem constant byte address 0x4 - core index']
  #allocation1 [shape = 'u32[144,128]{1,0:T(1,128)}', space=vmem, size = 0x12000, scoped, tag = 'internal scratch']
  %s0 = inlined_call_operand.hbm [shape: bf16[128,8], index: 0, kind: input, shape index: {}]
  %s1 = inlined_call_operand.hbm [shape: bf16[8,128], index: 1, kind: input, shape index: {}]
  %s2 = inlined_call_operand.hbm [shape: f32[1,128], index: 2, kind: input, shape index: {}]
  %s3 = inlined_call_operand.hbm [shape: f32[1,128], index: 3, kind: input, shape index: {}]
  %s4 = inlined_call_operand.hbm [shape: bf16[128,128], index: 4, kind: output, shape index: {0}]
  %s5 = inlined_call_operand.hbm [shape: f32[1,1,128], index: 5, kind: output, shape index: {1}]
  %s6 = inlined_call_operand.hbm [shape: f32[1,128,128], index: 6, kind: output, shape index: {2}]
  %7 = xla_tuple %s4, %s5, %s6
  %s8 = sld [smem:[#allocation0]]
  $region62: #{tpu_custom_call.1} parent=0
    _
  %s10 = ssub.s32 1, %s8
  %s11 = scalar_select 0, %s10, %s8
  $region1: #{tpu_custom_call.1} parent=0
    #allocation2 [shape = 'u8[32768]{0}', space=vmem, size = 0x8000, scoped, tag = 'input window, operand 0, single buffered']
    #allocation3 [shape = 's32[1]{0}', space=sflag, size = 0x4, scoped, tag = 'scoped memory for tpu_custom_call.1']
    #allocation4 [shape = 's32[1]{0}', space=sflag, size = 0x4, scoped, tag = 'scoped memory for tpu_custom_call.1']
    #allocation5 [shape = 'u8[2048]{0}', space=vmem, size = 0x800, scoped, tag = 'input window, operand 1, single buffered']
    #allocation6 [shape = 's32[1]{0}', space=sflag, size = 0x4, scoped, tag = 'scoped memory for tpu_custom_call.1']
    #allocation7 [shape = 'u8[512]{0}', space=vmem, size = 0x400, scoped, tag = 'input window, operand 2, single buffered']
    #allocation8 [shape = 'u8[512]{0}', space=vmem, size = 0x400, scoped, tag = 'input window, operand 3, single buffered']
    #allocation9 [shape = 's32[1]{0}', space=sflag, size = 0x4, scoped, tag = 'scoped memory for tpu_custom_call.1']
    #allocation10 [shape = 'u8[32768]{0}', space=vmem, size = 0x8000, scoped, tag = 'output window, operand 0, single buffered']
    #allocation11 [shape = 'u8[512]{0}', space=vmem, size = 0x400, scoped, tag = 'output window, operand 1, single buffered']
    #allocation12 [shape = 's32[1]{0}', space=sflag, size = 0x4, scoped, tag = 'scoped memory for tpu_custom_call.1']
    #allocation13 [shape = 'u8[65536]{0}', space=vmem, size = 0x10000, scoped, tag = 'output window, operand 2, single buffered']
    %12 = vsyncpa [#allocation3], 0
    %13 = vsyncpa [#allocation6], 0
    %14 = vsyncpa [#allocation9], 0
    %15 = vsyncpa [#allocation4], 0
    %16 = vsyncpa [#allocation12], 0
    // Predicated region
    $region2: #{tpu_custom_call.1} parent=1 // pred_check
      _
    $region3: #{tpu_custom_call.1} parent=1 // pred_check_branch
      %18 = sbr.rel (0) target = $region5
    $region4: #{tpu_custom_call.1} parent=1 // pred_region
      %s19 = sadd.s32 0, 0
      %s20 = smul.u32 16, %s19
      %s22 = ssub.s32 1024, 1024
      %23 = vsyncadd [#allocation3], %s22
      %s24 = smul.addr %s20, 64
      %s25 = scalar_lea.hbm %s0, %s24
      %s26 = sshll.u32 [#allocation2], 4
      %s27 = int_to_ptr.vmem [resolvable:$true] %s26
      %32 = dma.hbm_to_vmem [thread:$0]  %s25, 1024, %s27, [#allocation3], 64, 64, 4
    $region5: #{tpu_custom_call.1} parent=1 // pred_fallthru
      _
    // Predicated region
    $region6: #{tpu_custom_call.1} parent=1 // pred_check
      _
    $region7: #{tpu_custom_call.1} parent=1 // pred_check_branch
      %34 = sbr.rel (0) target = $region9
    $region8: #{tpu_custom_call.1} parent=1 // pred_region
      %s36 = ssub.s32 64, 64
      %37 = vsyncadd [#allocation6], %s36
      %s39 = sshll.u32 [#allocation5], 4
      %s40 = int_to_ptr.vmem [resolvable:$true] %s39
      %42 = dma.hbm_to_vmem [thread:$0]  %s1, 64, %s40, [#allocation6]
    $region9: #{tpu_custom_call.1} parent=1 // pred_fallthru
      _
    // Predicated region
    $region10: #{tpu_custom_call.1} parent=1 // pred_check
      _
    $region11: #{tpu_custom_call.1} parent=1 // pred_check_branch
      %44 = sbr.rel (0) target = $region13
    $region12: #{tpu_custom_call.1} parent=1 // pred_region
      %s46 = ssub.s32 16, 16
      %47 = vsyncadd [#allocation6], %s46
      %s49 = sshll.u32 [#allocation7], 4
      %s50 = int_to_ptr.vmem [resolvable:$true] %s49
      %52 = dma.hbm_to_vmem [thread:$0]  %s2, 16, %s50, [#allocation6]
    $region13: #{tpu_custom_call.1} parent=1 // pred_fallthru
      _
    // Predicated region
    $region14: #{tpu_custom_call.1} parent=1 // pred_check
      _
    $region15: #{tpu_custom_call.1} parent=1 // pred_check_branch
      %54 = sbr.rel (0) target = $region17
    $region16: #{tpu_custom_call.1} parent=1 // pred_region
      %s56 = ssub.s32 16, 16
      %57 = vsyncadd [#allocation9], %s56
      %s59 = sshll.u32 [#allocation8], 4
      %s60 = int_to_ptr.vmem [resolvable:$true] %s59
      %62 = dma.hbm_to_vmem [thread:$0]  %s3, 16, %s60, [#allocation9]
    $region17: #{tpu_custom_call.1} parent=1 // pred_fallthru
      _
    // Predicated region
    $region18: #{tpu_custom_call.1} parent=1 // pred_check
      _
    $region19: #{tpu_custom_call.1} parent=1 // pred_check_branch
      %64 = sbr.rel (0) target = $region21
    $region20: #{tpu_custom_call.1} parent=1 // pred_region
      %65 = dma.done [#allocation3], 1024
    $region21: #{tpu_custom_call.1} parent=1 // pred_fallthru
      _
    // Predicated region
    $region22: #{tpu_custom_call.1} parent=1 // pred_check
      _
    $region23: #{tpu_custom_call.1} parent=1 // pred_check_branch
      %67 = sbr.rel (0) target = $region25
    $region24: #{tpu_custom_call.1} parent=1 // pred_region
      %68 = dma.done [#allocation6], 64
    $region25: #{tpu_custom_call.1} parent=1 // pred_fallthru
      _
    // Predicated region
    $region26: #{tpu_custom_call.1} parent=1 // pred_check
      _
    $region27: #{tpu_custom_call.1} parent=1 // pred_check_branch
      %70 = sbr.rel (0) target = $region29
    $region28: #{tpu_custom_call.1} parent=1 // pred_region
      %71 = dma.done [#allocation6], 16
    $region29: #{tpu_custom_call.1} parent=1 // pred_fallthru
      _
    // Predicated region
    $region30: #{tpu_custom_call.1} parent=1 // pred_check
      _
    $region31: #{tpu_custom_call.1} parent=1 // pred_check_branch
      %73 = sbr.rel (0) target = $region33
    $region32: #{tpu_custom_call.1} parent=1 // pred_region
      %74 = dma.done [#allocation9], 16
    $region33: #{tpu_custom_call.1} parent=1 // pred_fallthru
      _
    %s75 = sadd.s32 0, 0
    %s76 = smul.u32 16, %s75
    %s77 = sadd.s32 0, 0
    %s78 = smul.u32 16, %s77
    %p80 = scmp.eq.s32.totalorder 0, 0
    // Predicated region
    $region34: #{tpu_custom_call.1} parent=1 // pred_check
      %p81 = pneg %p80
    $region35: #{tpu_custom_call.1} parent=1 // pred_check_branch
      %83 = sbr.rel (%p81) target = $region37
    $region36: #{tpu_custom_call.1} parent=1 // pred_region
      %84 = vst [vmem:[#allocation11] sm:$0x1] 0.0
      %85 = vst [vmem:[#allocation13] sm:$0xff] 0.0
      %86 = vst [vmem:[#allocation13 + $0x8] sm:$0xff] 0.0
      %87 = vst [vmem:[#allocation13 + $0x10] sm:$0xff] 0.0
      %88 = vst [vmem:[#allocation13 + $0x18] sm:$0xff] 0.0
      %89 = vst [vmem:[#allocation13 + $0x20] sm:$0xff] 0.0
      %90 = vst [vmem:[#allocation13 + $0x28] sm:$0xff] 0.0
      %91 = vst [vmem:[#allocation13 + $0x30] sm:$0xff] 0.0
      %92 = vst [vmem:[#allocation13 + $0x38] sm:$0xff] 0.0
      %93 = vst [vmem:[#allocation13 + $0x40] sm:$0xff] 0.0
      %94 = vst [vmem:[#allocation13 + $0x48] sm:$0xff] 0.0
      %95 = vst [vmem:[#allocation13 + $0x50] sm:$0xff] 0.0
      %96 = vst [vmem:[#allocation13 + $0x58] sm:$0xff] 0.0
      %97 = vst [vmem:[#allocation13 + $0x60] sm:$0xff] 0.0
      %98 = vst [vmem:[#allocation13 + $0x68] sm:$0xff] 0.0
      %99 = vst [vmem:[#allocation13 + $0x70] sm:$0xff] 0.0
      %100 = vst [vmem:[#allocation13 + $0x78] sm:$0xff] 0.0
    $region37: #{tpu_custom_call.1} parent=1 // pred_fallthru
      _
    %v101 = vld [vmem:[#allocation2] sm:$0xf]
    %v102 = vld [vmem:[#allocation2 + $0x4] sm:$0xf]
    %v103 = vld [vmem:[#allocation2 + $0x8] sm:$0xf]
    %v104 = vld [vmem:[#allocation2 + $0xc] sm:$0xf]
    %v105 = vld [vmem:[#allocation2 + $0x10] sm:$0xf]
    %v106 = vld [vmem:[#allocation2 + $0x14] sm:$0xf]
    %v107 = vld [vmem:[#allocation2 + $0x18] sm:$0xf]
    %v108 = vld [vmem:[#allocation2 + $0x1c] sm:$0xf]
    %v109 = vld [vmem:[#allocation2 + $0x20] sm:$0xf]
    %v110 = vld [vmem:[#allocation2 + $0x24] sm:$0xf]
    %v111 = vld [vmem:[#allocation2 + $0x28] sm:$0xf]
    %v112 = vld [vmem:[#allocation2 + $0x2c] sm:$0xf]
    %v113 = vld [vmem:[#allocation2 + $0x30] sm:$0xf]
    %v114 = vld [vmem:[#allocation2 + $0x34] sm:$0xf]
    %v115 = vld [vmem:[#allocation2 + $0x38] sm:$0xf]
    %v116 = vld [vmem:[#allocation2 + $0x3c] sm:$0xf]
    %v117 = vld [vmem:[#allocation5] sm:$0xf]
    %v134 = vunpack.c.l.b16 %v101
    %v135 = vunpack.c.l.b16 %v102
    %v136 = vunpack.c.l.b16 %v103
    %v137 = vunpack.c.l.b16 %v104
    %v138 = vunpack.c.l.b16 %v105
    %v139 = vunpack.c.l.b16 %v106
    %v140 = vunpack.c.l.b16 %v107
    %v141 = vunpack.c.l.b16 %v108
    %v142 = vunpack.c.l.b16 %v109
    %v143 = vunpack.c.l.b16 %v110
    %v144 = vunpack.c.l.b16 %v111
    %v145 = vunpack.c.l.b16 %v112
    %v146 = vunpack.c.l.b16 %v113
    %v147 = vunpack.c.l.b16 %v114
    %v148 = vunpack.c.l.b16 %v115
    %v149 = vunpack.c.l.b16 %v116
    %v150 = vpack.c.b16 %v135, %v134
    %v151 = vpack.c.b16 %v137, %v136
    %v152 = vpack.c.b16 %v139, %v138
    %v153 = vpack.c.b16 %v141, %v140
    %v154 = vpack.c.b16 %v143, %v142
    %v155 = vpack.c.b16 %v145, %v144
    %v156 = vpack.c.b16 %v147, %v146
    %v157 = vpack.c.b16 %v149, %v148
    %vm158 = vcmask 64512
    %v160 = vsel %vm158, %v150, 0
    %v163 = vsel %vm158, %v151, 0
    %v166 = vsel %vm158, %v152, 0
    %v169 = vsel %vm158, %v153, 0
    %v172 = vsel %vm158, %v154, 0
    %v175 = vsel %vm158, %v155, 0
    %v178 = vsel %vm158, %v156, 0
    %v181 = vsel %vm158, %v157, 0
    %vm183 = vcmask 1043456
    %v185 = vsel %vm183, %v117, 0
    %187 = vmatprep.subr.bf16.mxu0 0
    %188 = vmatpush1.bf16.msra.mxu0 %v185
    %189 = vmatprep.subr.bf16.mxu0 0
    %190 = vmatpush1.bf16.msra.mxu0 0
    %191 = vmatprep.subr.bf16.mxu0 0
    %192 = vmatpush1.bf16.msra.mxu0 0
    %193 = vmatprep.subr.bf16.mxu0 0
    %194 = vmatpush1.bf16.msra.mxu0 0
    %195 = vmatprep.subr.bf16.mxu0 0
    %196 = vmatpush1.bf16.msra.mxu0 0
    %197 = vmatprep.subr.bf16.mxu0 0
    %198 = vmatpush1.bf16.msra.mxu0 0
    %199 = vmatprep.subr.bf16.mxu0 0
    %200 = vmatpush1.bf16.msra.mxu0 0
    %201 = vmatprep.subr.bf16.mxu0 0
    %202 = vmatpush1.bf16.msra.mxu0 0
    %203 = vmatprep.subr.bf16.mxu0 0
    %204 = vmatpush1.bf16.msra.mxu0 0
    %205 = vmatprep.subr.bf16.mxu0 0
    %206 = vmatpush1.bf16.msra.mxu0 0
    %207 = vmatprep.subr.bf16.mxu0 0
    %208 = vmatpush1.bf16.msra.mxu0 0
    %209 = vmatprep.subr.bf16.mxu0 0
    %210 = vmatpush1.bf16.msra.mxu0 0
    %211 = vmatprep.subr.bf16.mxu0 0
    %212 = vmatpush1.bf16.msra.mxu0 0
    %213 = vmatprep.subr.bf16.mxu0 0
    %214 = vmatpush1.bf16.msra.mxu0 0
    %215 = vmatprep.subr.bf16.mxu0 0
    %216 = vmatpush1.bf16.msra.mxu0 0
    %217 = vmatprep.subr.bf16.mxu0 0
    %218 = vmatpush1.bf16.msra.mxu0 0
    %219 = vmatprep.mubr.bf16.mxu0 0
    %220 = vmatmul.mubr.bf16.gmra.mrb[0].mxu0 %v160
    %v221 = vpop.f32.mrb[0].mxu0
    %v222 = vadd.f32 0.0, %v221
    %v223 = vpop.f32.mrb[0].mxu0
    %v224 = vpop.f32.mrb[0].mxu0
    %v225 = vadd.f32 0.0, %v224
    %v226 = vpop.f32.mrb[0].mxu0
    %227 = vmatprep.mubr.bf16.mxu0 0
    %228 = vmatmul.mubr.bf16.gmra.mrb[0].mxu0 %v163
    %v229 = vpop.f32.mrb[0].mxu0
    %v230 = vadd.f32 0.0, %v229
    %v231 = vpop.f32.mrb[0].mxu0
    %v232 = vpop.f32.mrb[0].mxu0
    %v233 = vadd.f32 0.0, %v232
    %v234 = vpop.f32.mrb[0].mxu0
    %235 = vmatprep.mubr.bf16.mxu0 0
    %236 = vmatmul.mubr.bf16.gmra.mrb[0].mxu0 %v166
    %v237 = vpop.f32.mrb[0].mxu0
    %v238 = vadd.f32 0.0, %v237
    %v239 = vpop.f32.mrb[0].mxu0
    %v240 = vpop.f32.mrb[0].mxu0
    %v241 = vadd.f32 0.0, %v240
    %v242 = vpop.f32.mrb[0].mxu0
    %243 = vmatprep.mubr.bf16.mxu0 0
    %244 = vmatmul.mubr.bf16.gmra.mrb[0].mxu0 %v169
    %v245 = vpop.f32.mrb[0].mxu0
    %v246 = vadd.f32 0.0, %v245
    %v247 = vpop.f32.mrb[0].mxu0
    %v248 = vpop.f32.mrb[0].mxu0
    %v249 = vadd.f32 0.0, %v248
    %v250 = vpop.f32.mrb[0].mxu0
    %251 = vmatprep.mubr.bf16.mxu0 0
    %252 = vmatmul.mubr.bf16.gmra.mrb[0].mxu0 %v172
    %v253 = vpop.f32.mrb[0].mxu0
    %v254 = vadd.f32 0.0, %v253
    %v255 = vpop.f32.mrb[0].mxu0
    %v256 = vpop.f32.mrb[0].mxu0
    %v257 = vadd.f32 0.0, %v256
    %v258 = vpop.f32.mrb[0].mxu0
    %259 = vmatprep.mubr.bf16.mxu0 0
    %260 = vmatmul.mubr.bf16.gmra.mrb[0].mxu0 %v175
    %v261 = vpop.f32.mrb[0].mxu0
    %v262 = vadd.f32 0.0, %v261
    %v263 = vpop.f32.mrb[0].mxu0
    %v264 = vpop.f32.mrb[0].mxu0
    %v265 = vadd.f32 0.0, %v264
    %v266 = vpop.f32.mrb[0].mxu0
    %267 = vmatprep.mubr.bf16.mxu0 0
    %268 = vmatmul.mubr.bf16.gmra.mrb[0].mxu0 %v178
    %v269 = vpop.f32.mrb[0].mxu0
    %v270 = vadd.f32 0.0, %v269
    %v271 = vpop.f32.mrb[0].mxu0
    %v272 = vpop.f32.mrb[0].mxu0
    %v273 = vadd.f32 0.0, %v272
    %v274 = vpop.f32.mrb[0].mxu0
    %275 = vmatprep.mubr.bf16.mxu0 0
    %276 = vmatmul.mubr.bf16.gmra.mrb[0].mxu0 %v181
    %v277 = vpop.f32.mrb[0].mxu0
    %v278 = vadd.f32 0.0, %v277
    %v279 = vpop.f32.mrb[0].mxu0
    %v280 = vpop.f32.mrb[0].mxu0
    %v281 = vadd.f32 0.0, %v280
    %v282 = vpop.f32.mrb[0].mxu0
    %283 = vdwg.mxu0
    %v284 = vld [vmem:[#allocation7] sm:$0x1]
    %v286 = vlaneseq
    %v287 = vshrl.u32 %v286, 7
    %v288 = vsub.s32 0, %v287
    %v289 = vrot.slane %v284, %v288
    %v291 = vmul.f32 %v222, %v289
    %v292 = vmul.f32 %v225, %v289
    %v293 = vmul.f32 %v230, %v289
    %v294 = vmul.f32 %v233, %v289
    %v295 = vmul.f32 %v238, %v289
    %v296 = vmul.f32 %v241, %v289
    %v297 = vmul.f32 %v246, %v289
    %v298 = vmul.f32 %v249, %v289
    %v299 = vmul.f32 %v254, %v289
    %v300 = vmul.f32 %v257, %v289
    %v301 = vmul.f32 %v262, %v289
    %v302 = vmul.f32 %v265, %v289
    %v303 = vmul.f32 %v270, %v289
    %v304 = vmul.f32 %v273, %v289
    %v305 = vmul.f32 %v278, %v289
    %v306 = vmul.f32 %v281, %v289
    %v307 = vld [vmem:[#allocation8] sm:$0x1]
    %v309 = vlaneseq
    %v310 = vshrl.u32 %v309, 7
    %v311 = vsub.s32 0, %v310
    %v312 = vrot.slane %v307, %v311
    %v314 = vadd.f32 %v291, %v312
    %v315 = vadd.f32 %v292, %v312
    %v316 = vadd.f32 %v293, %v312
    %v317 = vadd.f32 %v294, %v312
    %v318 = vadd.f32 %v295, %v312
    %v319 = vadd.f32 %v296, %v312
    %v320 = vadd.f32 %v297, %v312
    %v321 = vadd.f32 %v298, %v312
    %v322 = vadd.f32 %v299, %v312
    %v323 = vadd.f32 %v300, %v312
    %v324 = vadd.f32 %v301, %v312
    %v325 = vadd.f32 %v302, %v312
    %v326 = vadd.f32 %v303, %v312
    %v327 = vadd.f32 %v304, %v312
    %v328 = vadd.f32 %v305, %v312
    %v329 = vadd.f32 %v306, %v312
    %v330 = vmax.f32 %v314, 0.0
    %v331 = vmax.f32 %v315, 0.0
    %v332 = vmax.f32 %v316, 0.0
    %v333 = vmax.f32 %v317, 0.0
    %v334 = vmax.f32 %v318, 0.0
    %v335 = vmax.f32 %v319, 0.0
    %v336 = vmax.f32 %v320, 0.0
    %v337 = vmax.f32 %v321, 0.0
    %v338 = vmax.f32 %v322, 0.0
    %v339 = vmax.f32 %v323, 0.0
    %v340 = vmax.f32 %v324, 0.0
    %v341 = vmax.f32 %v325, 0.0
    %v342 = vmax.f32 %v326, 0.0
    %v343 = vmax.f32 %v327, 0.0
    %v344 = vmax.f32 %v328, 0.0
    %v345 = vmax.f32 %v329, 0.0
    %v346 = vpack.c.bf16 %v331, %v330
    %v347 = vpack.c.bf16 %v333, %v332
    %v348 = vpack.c.bf16 %v335, %v334
    %v349 = vpack.c.bf16 %v337, %v336
    %v350 = vpack.c.bf16 %v339, %v338
    %v351 = vpack.c.bf16 %v341, %v340
    %v352 = vpack.c.bf16 %v343, %v342
    %v353 = vpack.c.bf16 %v345, %v344
    %v362 = vunpack.c.l.b16 %v346
    %v363 = vunpack.c.h.b16 %v346
    %v364 = vunpack.c.l.b16 %v347
    %v365 = vunpack.c.h.b16 %v347
    %v366 = vunpack.c.l.b16 %v348
    %v367 = vunpack.c.h.b16 %v348
    %v368 = vunpack.c.l.b16 %v349
    %v369 = vunpack.c.h.b16 %v349
    %v370 = vunpack.c.l.b16 %v350
    %v371 = vunpack.c.h.b16 %v350
    %v372 = vunpack.c.l.b16 %v351
    %v373 = vunpack.c.h.b16 %v351
    %v374 = vunpack.c.l.b16 %v352
    %v375 = vunpack.c.h.b16 %v352
    %v376 = vunpack.c.l.b16 %v353
    %v377 = vunpack.c.h.b16 %v353
    %v378 = vpack.c.b16 %v362, %v362
    %v379 = vpack.c.b16 %v363, %v363
    %v380 = vpack.c.b16 %v364, %v364
    %v381 = vpack.c.b16 %v365, %v365
    %v382 = vpack.c.b16 %v366, %v366
    %v383 = vpack.c.b16 %v367, %v367
    %v384 = vpack.c.b16 %v368, %v368
    %v385 = vpack.c.b16 %v369, %v369
    %v386 = vpack.c.b16 %v370, %v370
    %v387 = vpack.c.b16 %v371, %v371
    %v388 = vpack.c.b16 %v372, %v372
    %v389 = vpack.c.b16 %v373, %v373
    %v390 = vpack.c.b16 %v374, %v374
    %v391 = vpack.c.b16 %v375, %v375
    %v392 = vpack.c.b16 %v376, %v376
    %v393 = vpack.c.b16 %v377, %v377
    %410 = vst [vmem:[#allocation10] sm:$0xf] %v378
    %411 = vst [vmem:[#allocation10 + $0x4] sm:$0xf] %v379
    %412 = vst [vmem:[#allocation10 + $0x8] sm:$0xf] %v380
    %413 = vst [vmem:[#allocation10 + $0xc] sm:$0xf] %v381
    %414 = vst [vmem:[#allocation10 + $0x10] sm:$0xf] %v382
    %415 = vst [vmem:[#allocation10 + $0x14] sm:$0xf] %v383
    %416 = vst [vmem:[#allocation10 + $0x18] sm:$0xf] %v384
    %417 = vst [vmem:[#allocation10 + $0x1c] sm:$0xf] %v385
    %418 = vst [vmem:[#allocation10 + $0x20] sm:$0xf] %v386
    %419 = vst [vmem:[#allocation10 + $0x24] sm:$0xf] %v387
    %420 = vst [vmem:[#allocation10 + $0x28] sm:$0xf] %v388
    %421 = vst [vmem:[#allocation10 + $0x2c] sm:$0xf] %v389
    %422 = vst [vmem:[#allocation10 + $0x30] sm:$0xf] %v390
    %423 = vst [vmem:[#allocation10 + $0x34] sm:$0xf] %v391
    %424 = vst [vmem:[#allocation10 + $0x38] sm:$0xf] %v392
    %425 = vst [vmem:[#allocation10 + $0x3c] sm:$0xf] %v393
    %v426 = vld [vmem:[#allocation11] sm:$0x1]
    %v427 = vadd.f32 %v330, %v331
    %v428 = vadd.f32 %v427, %v332
    %v429 = vadd.f32 %v428, %v333
    %v430 = vadd.f32 %v429, %v334
    %v431 = vadd.f32 %v430, %v335
    %v432 = vadd.f32 %v431, %v336
    %v433 = vadd.f32 %v432, %v337
    %v434 = vadd.f32 %v433, %v338
    %v435 = vadd.f32 %v434, %v339
    %v436 = vadd.f32 %v435, %v340
    %v437 = vadd.f32 %v436, %v341
    %v438 = vadd.f32 %v437, %v342
    %v439 = vadd.f32 %v438, %v343
    %v440 = vadd.f32 %v439, %v344
    %v441 = vadd.f32 %v440, %v345
    %v442 = vrot.slane %v441, 4
    %v443 = vadd.f32 %v441, %v442
    %v444 = vrot.slane %v443, 2
    %v445 = vadd.f32 %v443, %v444
    %v446 = vrot.slane %v445, 1
    %v447 = vadd.f32 %v445, %v446
    %v448 = vadd.f32 %v426, %v447
    %449 = vst [vmem:[#allocation11] sm:$0x1] %v448
    %v450 = vld [vmem:[#allocation13] sm:$0xff]
    %v451 = vld [vmem:[#allocation13 + $0x8] sm:$0xff]
    %v452 = vld [vmem:[#allocation13 + $0x10] sm:$0xff]
    %v453 = vld [vmem:[#allocation13 + $0x18] sm:$0xff]
    %v454 = vld [vmem:[#allocation13 + $0x20] sm:$0xff]
    %v455 = vld [vmem:[#allocation13 + $0x28] sm:$0xff]
    %v456 = vld [vmem:[#allocation13 + $0x30] sm:$0xff]
    %v457 = vld [vmem:[#allocation13 + $0x38] sm:$0xff]
    %v458 = vld [vmem:[#allocation13 + $0x40] sm:$0xff]
    %v459 = vld [vmem:[#allocation13 + $0x48] sm:$0xff]
    %v460 = vld [vmem:[#allocation13 + $0x50] sm:$0xff]
    %v461 = vld [vmem:[#allocation13 + $0x58] sm:$0xff]
    %v462 = vld [vmem:[#allocation13 + $0x60] sm:$0xff]
    %v463 = vld [vmem:[#allocation13 + $0x68] sm:$0xff]
    %v464 = vld [vmem:[#allocation13 + $0x70] sm:$0xff]
    %v465 = vld [vmem:[#allocation13 + $0x78] sm:$0xff]
    %466 = vxpose.xlu0.c.b16.start [1/8] %v346, 128
    %467 = vxpose.xlu0.c.b16.cont [2/8] %v347, 128
    %468 = vxpose.xlu0.c.b16.cont [3/8] %v348, 128
    %469 = vxpose.xlu0.c.b16.cont [4/8] %v349, 128
    %470 = vxpose.xlu0.c.b16.cont [5/8] %v350, 128
    %471 = vxpose.xlu0.c.b16.cont [6/8] %v351, 128
    %472 = vxpose.xlu0.c.b16.cont [7/8] %v352, 128
    %473 = vxpose.xlu0.c.b16.end [8/8] %v353, 128
    %v474 = vpop.trf.xlu0
    %v475 = vpop.trf.xlu0
    %v476 = vpop.trf.xlu0
    %v477 = vpop.trf.xlu0
    %v478 = vpop.trf.xlu0
    %v479 = vpop.trf.xlu0
    %v480 = vpop.trf.xlu0
    %v481 = vpop.trf.xlu0
    %482 = vmatprep.subr.bf16.mxu0 0
    %483 = vmatpush1.bf16.msra.mxu0 %v346
    %484 = vmatprep.subr.bf16.mxu0 0
    %485 = vmatpush1.bf16.msra.mxu0 %v347
    %486 = vmatprep.subr.bf16.mxu0 0
    %487 = vmatpush1.bf16.msra.mxu0 %v348
    %488 = vmatprep.subr.bf16.mxu0 0
    %489 = vmatpush1.bf16.msra.mxu0 %v349
    %490 = vmatprep.subr.bf16.mxu0 0
    %491 = vmatpush1.bf16.msra.mxu0 %v350
    %492 = vmatprep.subr.bf16.mxu0 0
    %493 = vmatpush1.bf16.msra.mxu0 %v351
    %494 = vmatprep.subr.bf16.mxu0 0
    %495 = vmatpush1.bf16.msra.mxu0 %v352
    %496 = vmatprep.subr.bf16.mxu0 0
    %497 = vmatpush1.bf16.msra.mxu0 %v353
    %498 = vmatprep.subr.bf16.mxu0 0
    %499 = vmatpush1.bf16.msra.mxu0 0
    %500 = vmatprep.subr.bf16.mxu0 0
    %501 = vmatpush1.bf16.msra.mxu0 0
    %502 = vmatprep.subr.bf16.mxu0 0
    %503 = vmatpush1.bf16.msra.mxu0 0
    %504 = vmatprep.subr.bf16.mxu0 0
    %505 = vmatpush1.bf16.msra.mxu0 0
    %506 = vmatprep.subr.bf16.mxu0 0
    %507 = vmatpush1.bf16.msra.mxu0 0
    %508 = vmatprep.subr.bf16.mxu0 0
    %509 = vmatpush1.bf16.msra.mxu0 0
    %510 = vmatprep.subr.bf16.mxu0 0
    %511 = vmatpush1.bf16.msra.mxu0 0
    %512 = vmatprep.subr.bf16.mxu0 0
    %513 = vmatpush1.bf16.msra.mxu0 0
    %514 = vmatprep.mubr.bf16.mxu0 0
    %515 = vmatmul.mubr.bf16.gmra.mrb[0].mxu0 %v474
    %v516 = vpop.f32.mrb[0].mxu0
    %v517 = vadd.f32 0.0, %v516
    %v518 = vpop.f32.mrb[0].mxu0
    %v519 = vpop.f32.mrb[0].mxu0
    %v520 = vadd.f32 0.0, %v519
    %v521 = vpop.f32.mrb[0].mxu0
    %522 = vmatprep.mubr.bf16.mxu0 0
    %523 = vmatmul.mubr.bf16.gmra.mrb[0].mxu0 %v475
    %v524 = vpop.f32.mrb[0].mxu0
    %v525 = vadd.f32 0.0, %v524
    %v526 = vpop.f32.mrb[0].mxu0
    %v527 = vpop.f32.mrb[0].mxu0
    %v528 = vadd.f32 0.0, %v527
    %v529 = vpop.f32.mrb[0].mxu0
    %530 = vmatprep.mubr.bf16.mxu0 0
    %531 = vmatmul.mubr.bf16.gmra.mrb[0].mxu0 %v476
    %v532 = vpop.f32.mrb[0].mxu0
    %v533 = vadd.f32 0.0, %v532
    %v534 = vpop.f32.mrb[0].mxu0
    %v535 = vpop.f32.mrb[0].mxu0
    %v536 = vadd.f32 0.0, %v535
    %v537 = vpop.f32.mrb[0].mxu0
    %538 = vmatprep.mubr.bf16.mxu0 0
    %539 = vmatmul.mubr.bf16.gmra.mrb[0].mxu0 %v477
    %v540 = vpop.f32.mrb[0].mxu0
    %v541 = vadd.f32 0.0, %v540
    %v542 = vpop.f32.mrb[0].mxu0
    %v543 = vpop.f32.mrb[0].mxu0
    %v544 = vadd.f32 0.0, %v543
    %v545 = vpop.f32.mrb[0].mxu0
    %546 = vmatprep.mubr.bf16.mxu0 0
    %547 = vmatmul.mubr.bf16.gmra.mrb[0].mxu0 %v478
    %v548 = vpop.f32.mrb[0].mxu0
    %v549 = vadd.f32 0.0, %v548
    %v550 = vpop.f32.mrb[0].mxu0
    %v551 = vpop.f32.mrb[0].mxu0
    %v552 = vadd.f32 0.0, %v551
    %v553 = vpop.f32.mrb[0].mxu0
    %554 = vmatprep.mubr.bf16.mxu0 0
    %555 = vmatmul.mubr.bf16.gmra.mrb[0].mxu0 %v479
    %v556 = vpop.f32.mrb[0].mxu0
    %v557 = vadd.f32 0.0, %v556
    %v558 = vpop.f32.mrb[0].mxu0
    %v559 = vpop.f32.mrb[0].mxu0
    %v560 = vadd.f32 0.0, %v559
    %v561 = vpop.f32.mrb[0].mxu0
    %562 = vmatprep.mubr.bf16.mxu0 0
    %563 = vmatmul.mubr.bf16.gmra.mrb[0].mxu0 %v480
    %v564 = vpop.f32.mrb[0].mxu0
    %v565 = vadd.f32 0.0, %v564
    %v566 = vpop.f32.mrb[0].mxu0
    %v567 = vpop.f32.mrb[0].mxu0
    %v568 = vadd.f32 0.0, %v567
    %v569 = vpop.f32.mrb[0].mxu0
    %570 = vmatprep.mubr.bf16.mxu0 0
    %571 = vmatmul.mubr.bf16.gmra.mrb[0].mxu0 %v481
    %v572 = vpop.f32.mrb[0].mxu0
    %v573 = vadd.f32 0.0, %v572
    %v574 = vpop.f32.mrb[0].mxu0
    %v575 = vpop.f32.mrb[0].mxu0
    %v576 = vadd.f32 0.0, %v575
    %v577 = vpop.f32.mrb[0].mxu0
    %578 = vdwg.mxu0
    %v579 = vadd.f32 %v450, %v517
    %v580 = vadd.f32 %v451, %v520
    %v581 = vadd.f32 %v452, %v525
    %v582 = vadd.f32 %v453, %v528
    %v583 = vadd.f32 %v454, %v533
    %v584 = vadd.f32 %v455, %v536
    %v585 = vadd.f32 %v456, %v541
    %v586 = vadd.f32 %v457, %v544
    %v587 = vadd.f32 %v458, %v549
    %v588 = vadd.f32 %v459, %v552
    %v589 = vadd.f32 %v460, %v557
    %v590 = vadd.f32 %v461, %v560
    %v591 = vadd.f32 %v462, %v565
    %v592 = vadd.f32 %v463, %v568
    %v593 = vadd.f32 %v464, %v573
    %v594 = vadd.f32 %v465, %v576
    %595 = vst [vmem:[#allocation13] sm:$0xff] %v579
    %596 = vst [vmem:[#allocation13 + $0x8] sm:$0xff] %v580
    %597 = vst [vmem:[#allocation13 + $0x10] sm:$0xff] %v581
    %598 = vst [vmem:[#allocation13 + $0x18] sm:$0xff] %v582
    %599 = vst [vmem:[#allocation13 + $0x20] sm:$0xff] %v583
    %600 = vst [vmem:[#allocation13 + $0x28] sm:$0xff] %v584
    %601 = vst [vmem:[#allocation13 + $0x30] sm:$0xff] %v585
    %602 = vst [vmem:[#allocation13 + $0x38] sm:$0xff] %v586
    %603 = vst [vmem:[#allocation13 + $0x40] sm:$0xff] %v587
    %604 = vst [vmem:[#allocation13 + $0x48] sm:$0xff] %v588
    %605 = vst [vmem:[#allocation13 + $0x50] sm:$0xff] %v589
    %606 = vst [vmem:[#allocation13 + $0x58] sm:$0xff] %v590
    %607 = vst [vmem:[#allocation13 + $0x60] sm:$0xff] %v591
    %608 = vst [vmem:[#allocation13 + $0x68] sm:$0xff] %v592
    %609 = vst [vmem:[#allocation13 + $0x70] sm:$0xff] %v593
    %610 = vst [vmem:[#allocation13 + $0x78] sm:$0xff] %v594
    // Predicated region
    $region38: #{tpu_custom_call.1} parent=1 // pred_check
      _
    $region39: #{tpu_custom_call.1} parent=1 // pred_check_branch
      %612 = sbr.rel (0) target = $region41
    $region40: #{tpu_custom_call.1} parent=1 // pred_region
      %s613 = sadd.s32 0, 0
      %s614 = smul.u32 16, %s613
      %s616 = ssub.s32 1024, 1024
      %617 = vsyncadd [#allocation4], %s616
      %s618 = smul.addr %s614, 64
      %s619 = scalar_lea.hbm %s4, %s618
      %s620 = sshll.u32 [#allocation10], 4
      %s621 = int_to_ptr.vmem [resolvable:$true] %s620
      %626 = dma.vmem_to_hbm [thread:$0]  %s621, 1024, %s619, [#allocation4], 64, 64, 4
    $region41: #{tpu_custom_call.1} parent=1 // pred_fallthru
      _
    // Predicated region
    $region42: #{tpu_custom_call.1} parent=1 // pred_check
      _
    $region43: #{tpu_custom_call.1} parent=1 // pred_check_branch
      %628 = sbr.rel (0) target = $region45
    $region44: #{tpu_custom_call.1} parent=1 // pred_region
      %s630 = ssub.s32 16, 16
      %631 = vsyncadd [#allocation12], %s630
      %s633 = sshll.u32 [#allocation11], 4
      %s634 = int_to_ptr.vmem [resolvable:$true] %s633
      %636 = dma.vmem_to_hbm [thread:$0]  %s634, 16, %s5, [#allocation12]
    $region45: #{tpu_custom_call.1} parent=1 // pred_fallthru
      _
    // Predicated region
    $region46: #{tpu_custom_call.1} parent=1 // pred_check
      _
    $region47: #{tpu_custom_call.1} parent=1 // pred_check_branch
      %638 = sbr.rel (0) target = $region49
    $region48: #{tpu_custom_call.1} parent=1 // pred_region
      %s640 = ssub.s32 2048, 2048
      %641 = vsyncadd [#allocation12], %s640
      %s642 = sshll.u32 [#allocation13], 4
      %s643 = int_to_ptr.vmem [resolvable:$true] %s642
      %648 = dma.vmem_to_hbm [thread:$0]  %s643, 2048, %s6, [#allocation12], 128, 128, 8
    $region49: #{tpu_custom_call.1} parent=1 // pred_fallthru
      _
    // Predicated region
    $region50: #{tpu_custom_call.1} parent=1 // pred_check
      _
    $region51: #{tpu_custom_call.1} parent=1 // pred_check_branch
      %650 = sbr.rel (0) target = $region53
    $region52: #{tpu_custom_call.1} parent=1 // pred_region
      %651 = dma.done [#allocation4], 1024
    $region53: #{tpu_custom_call.1} parent=1 // pred_fallthru
      _
    // Predicated region
    $region54: #{tpu_custom_call.1} parent=1 // pred_check
      _
    $region55: #{tpu_custom_call.1} parent=1 // pred_check_branch
      %653 = sbr.rel (0) target = $region57
    $region56: #{tpu_custom_call.1} parent=1 // pred_region
      %654 = dma.done [#allocation12], 16
    $region57: #{tpu_custom_call.1} parent=1 // pred_fallthru
      _
    // Predicated region
    $region58: #{tpu_custom_call.1} parent=1 // pred_check
      _
    $region59: #{tpu_custom_call.1} parent=1 // pred_check_branch
      %656 = sbr.rel (0) target = $region61
    $region60: #{tpu_custom_call.1} parent=1 // pred_region
      %657 = dma.done [#allocation12], 2048
    $region61: #{tpu_custom_call.1} parent=1 // pred_fallthru
      _
    %658 = vsyncpa [#allocation3], 1
    %659 = vsyncpa [#allocation6], 1
    %660 = vsyncpa [#allocation9], 1
    %661 = vsyncpa [#allocation4], 1
    %662 = vsyncpa [#allocation12], 1

</llo_original>
